<compile_context>
chip_gen: v6e
topology: v6e:2x2x1
jax: 0.10.0
libtpu: 0.0.40
codegen_flags: <defaults>
</compile_context>

<pallas_src>
import functools

import jax
import jax.numpy as jnp
from jax.experimental import pallas as pl
from jax.experimental.pallas import tpu as pltpu

_MIB = 1024 * 1024


def _gelu_new(x):
    # GPT-2 "gelu_new": 0.5*x*(1+tanh(sqrt(2/pi)*(x + 0.044715*x^3))),
    # inner term factored as x*(1 + 0.044715*x*x) to save one vmul per element.
    c = 0.7978845608028654  # sqrt(2/pi)
    return 0.5 * x * (1.0 + jnp.tanh(c * x * (1.0 + 0.044715 * (x * x))))


# ----------------------------- kernels -----------------------------


def _mlp_resident_kernel(x_ref, w1_ref, b1_ref, w2_ref, b2_ref, o_ref, *, n_sub):
    """Whole MLP for one row tile; weights fully VMEM-resident."""
    x = x_ref[...]
    inter = w1_ref.shape[1]
    sub = inter // n_sub
    acc = None
    for j in range(n_sub):  # static unroll: dot2(j) overlaps dot1/gelu(j+1) on MXU/VPU
        lo, hi = j * sub, (j + 1) * sub
        h = jnp.dot(x, w1_ref[:, lo:hi], preferred_element_type=jnp.float32)
        h = _gelu_new(h + b1_ref[:, lo:hi])
        p = jnp.dot(h.astype(w2_ref.dtype), w2_ref[lo:hi, :],
                    preferred_element_type=jnp.float32)
        acc = p if acc is None else acc + p
    o_ref[...] = (acc + b2_ref[...]).astype(o_ref.dtype)


def _mlp_streamed_kernel(x_ref, w1_ref, b1_ref, w2_ref, b2_ref, o_ref, acc_ref, *, n_sub):
    """One (row tile, k tile) step: partial c_fc -> gelu -> partial c_proj,
    accumulated in the f32 VMEM scratch. gelu is elementwise over the intermediate
    dim, so per-k gelu + accumulation is exact."""
    k = pl.program_id(1)

    @pl.when(k == 0)
    def _():
        acc_ref[...] = jnp.zeros_like(acc_ref)

    x = x_ref[...]
    ti = w1_ref.shape[1]
    sub = ti // n_sub
    for j in range(n_sub):  # static unroll to hide gelu under the MXU
        lo, hi = j * sub, (j + 1) * sub
        h = jnp.dot(x, w1_ref[:, lo:hi], preferred_element_type=jnp.float32)
        h = _gelu_new(h + b1_ref[:, lo:hi])
        acc_ref[...] += jnp.dot(h.astype(w2_ref.dtype), w2_ref[lo:hi, :],
                                preferred_element_type=jnp.float32)

    @pl.when(k == pl.num_programs(1) - 1)
    def _():
        o_ref[...] = (acc_ref[...] + b2_ref[...]).astype(o_ref.dtype)


# --------------------------- tiling helpers ---------------------------


def _round_up(x, m):
    return ((x + m - 1) // m) * m


def _pick_tile(total, target, gran):
    """Tile size (multiple of `gran`). Prefers an exact divisor of `total` (no
    padding); otherwise returns ~target and the caller zero-pads `total`."""
    target = max(gran, (target // gran) * gran)
    if total <= target:
        return _round_up(total, gran)
    best = 0
    t = target
    while t >= gran:
        if total % t == 0:
            best = t
            break
        t -= gran
    if best >= max(gran, target // 2):
        return best
    return target


def _pick_subchunk(inter, tm):
    """Static sub-chunk of the intermediate dim per inner step: bounds the f32
    gelu intermediate to ~8 MiB and lets dot2(j) interleave with dot1/gelu(j+1)."""
    if inter % 128 != 0 or inter <= 256:
        return inter
    cap = max(128, (2 * _MIB // max(tm, 1)) // 128 * 128)
    sub, t = 128, 128
    limit = min(inter // 2, cap)
    while t <= limit:
        if inter % t == 0:
            sub = t
        t += 128
    return sub


def _tpu_tuning():
    """(row-tile target, k-tile target, VMEM byte budget) per chip generation."""
    vmem_cap = 64 * _MIB
    name = ""
    try:
        info = pltpu.get_tpu_info()
        vmem_cap = int(getattr(info, "vmem_capacity_bytes", vmem_cap) or vmem_cap)
        name = str(getattr(info, "chip_version", "") or "").lower()
    except Exception:
        pass
    if vmem_cap >= 120 * _MIB:                    # v5e / v6e class (128 MiB VMEM)
        budget = 100 * _MIB                       # lift the old 64 MiB cap
        tm_target = 512 if "5" in name else 768   # v6e needs the largest row tile
    else:                                         # v7x class (64 MiB VMEM)
        budget = min(max(vmem_cap - 12 * _MIB, 32 * _MIB), 52 * _MIB)
        tm_target = 512
    return tm_target, 2048, budget


def _streamed_vmem_bytes(tm, ti, E, x_bytes, out_bytes, w_bytes, n_sub):
    io = 2 * tm * E * (x_bytes + out_bytes)          # x / out blocks (double-buffered)
    wts = 2 * 2 * E * ti * w_bytes                   # W1 / W2 k-tiles (double-buffered)
    bias = 2 * (ti + E) * w_bytes
    acc = tm * E * 4                                 # f32 accumulator scratch
    tmp = 2 * tm * max(1, ti // n_sub) * 4           # gelu intermediates + headroom
    return io + wts + bias + acc + tmp


def _resident_vmem_bytes(tm, E, inter, x_bytes, out_bytes, w_bytes, n_sub):
    io = 2 * tm * E * (x_bytes + out_bytes)
    wts = 2 * (2 * E * inter + inter + E) * w_bytes  # conservatively count 2 buffers
    acc = tm * E * 4                                 # live f32 partials
    tmp = 2 * tm * max(1, inter // n_sub) * 4
    return io + wts + acc + tmp


# ------------------------------ wrapper ------------------------------


def gpt2_mlp(hidden_states, w_fc, b_fc, w_proj, b_proj, *,
             row_tile=None, k_tile=None, weights_resident=None):
    """GPT2MLP forward. hidden_states: [B,S,E]; w_fc: [E,I]; b_fc: [I];
    w_proj: [I,E]; b_proj: [E]. Dropout (resid_pdrop) is identity (eval mode)."""
    B, S, E = hidden_states.shape
    I = w_fc.shape[1]
    assert w_fc.shape == (E, I) and w_proj.shape == (I, E)
    assert b_fc.shape == (I,) and b_proj.shape == (E,)
    M = B * S
    x2d = hidden_states.reshape(M, E)

    x_bytes = jnp.dtype(hidden_states.dtype).itemsize
    w_bytes = jnp.dtype(w_fc.dtype).itemsize
    out_bytes = x_bytes
    row_gran = max(8, 32 // x_bytes)                 # sublane granularity for row tiles

    tm_target, ti_target, budget = _tpu_tuning()
    tile_budget = int(0.8 * budget)

    tm = row_tile if row_tile is not None else _pick_tile(M, tm_target, row_gran)
    assert tm % row_gran == 0, f"row_tile must be a multiple of {row_gran}"

    # ---- decide between weight-resident fast path and k-streamed path ----
    sub_res = _pick_subchunk(I, tm)
    n_sub_res = max(1, I // sub_res)
    resident_fp = _resident_vmem_bytes(tm, E, I, x_bytes, out_bytes, w_bytes, n_sub_res)
    if weights_resident is None:
        use_resident = (k_tile is None) and (resident_fp <= tile_budget)
    else:
        use_resident = bool(weights_resident)

    if use_resident:
        # shrink row tile if activations/intermediates don't fit beside the weights
        while resident_fp > tile_budget and tm > row_gran and row_tile is None:
            tm = _pick_tile(M, max(row_gran, tm // 2), row_gran)
            sub_res = _pick_subchunk(I, tm)
            n_sub_res = max(1, I // sub_res)
            resident_fp = _resident_vmem_bytes(tm, E, I, x_bytes, out_bytes, w_bytes,
                                               n_sub_res)

        M_pad = _round_up(M, tm)
        x_in = jnp.pad(x2d, ((0, M_pad - M), (0, 0))) if M_pad != M else x2d
        grid = (M_pad // tm,)

        cost = pl.CostEstimate(
            flops=4 * M_pad * I * E,
            transcendentals=M_pad * I,
            bytes_accessed=(M_pad * E * (x_bytes + out_bytes)
                            + (2 * E * I + I + E) * w_bytes),   # weights read once
        )
        vmem_limit = int(min(budget, max(32 * _MIB, int(1.25 * resident_fp))))

        out2d = pl.pallas_call(
            functools.partial(_mlp_resident_kernel, n_sub=n_sub_res),
            out_shape=jax.ShapeDtypeStruct((M_pad, E), hidden_states.dtype),
            grid_spec=pltpu.PrefetchScalarGridSpec(
                num_scalar_prefetch=0,
                grid=grid,
                in_specs=[
                    pl.BlockSpec((tm, E), lambda i: (i, 0)),   # x row tile
                    pl.BlockSpec((E, I), lambda i: (0, 0)),    # W1 resident
                    pl.BlockSpec((1, I), lambda i: (0, 0)),    # b1 resident
                    pl.BlockSpec((I, E), lambda i: (0, 0)),    # W2 resident
                    pl.BlockSpec((1, E), lambda i: (0, 0)),    # b2 resident
                ],
                out_specs=pl.BlockSpec((tm, E), lambda i: (i, 0)),
            ),
            compiler_params=pltpu.CompilerParams(
                dimension_semantics=("parallel",),
                vmem_limit_bytes=vmem_limit,
            ),
            cost_estimate=cost,
        )(x_in, w_fc, b_fc.reshape(1, I), w_proj, b_proj.reshape(1, E))
        out2d = out2d[:M] if M_pad != M else out2d
        return out2d.reshape(B, S, E)

    # ----------------------------- k-streamed path -----------------------------
    ti = k_tile if k_tile is not None else _pick_tile(I, ti_target, 128)
    assert ti % 128 == 0, "k_tile must be a multiple of 128"

    if row_tile is None and k_tile is None:
        # Shrink to fit VMEM budget; shrink the k tile first since the row tile
        # sets the compute-vs-HBM balance (weight re-streaming).
        while True:
            n_sub = max(1, ti // _pick_subchunk(ti, tm))
            fp = _streamed_vmem_bytes(tm, ti, E, x_bytes, out_bytes, w_bytes, n_sub)
            if fp <= tile_budget:
                break
            if ti > 512:
                ti = _pick_tile(I, max(128, ti // 2), 128)
            elif tm > row_gran:
                tm = _pick_tile(M, max(row_gran, tm // 2), row_gran)
            elif ti > 128:
                ti = _pick_tile(I, max(128, ti // 2), 128)
            else:
                break

    sub = _pick_subchunk(ti, tm)
    n_sub = max(1, ti // sub)
    fp = _streamed_vmem_bytes(tm, ti, E, x_bytes, out_bytes, w_bytes, n_sub)

    M_pad = _round_up(M, tm)
    I_pad = _round_up(I, ti)
    x_in = jnp.pad(x2d, ((0, M_pad - M), (0, 0))) if M_pad != M else x2d
    if I_pad != I:
        # zero padding of the intermediate dim is exact: gelu_new(0) == 0
        w_fc = jnp.pad(w_fc, ((0, 0), (0, I_pad - I)))
        b_fc = jnp.pad(b_fc, (0, I_pad - I))
        w_proj = jnp.pad(w_proj, ((0, I_pad - I), (0, 0)))

    grid = (M_pad // tm, I_pad // ti)                # reduction (k) axis last
    n_row_tiles = grid[0]

    cost = pl.CostEstimate(
        flops=4 * M_pad * I_pad * E,
        transcendentals=M_pad * I_pad,
        bytes_accessed=(M_pad * E * (x_bytes + out_bytes)
                        + n_row_tiles * (2 * E * I_pad + I_pad) * w_bytes  # re-streamed
                        + E * w_bytes),
    )
    vmem_limit = int(min(budget, max(32 * _MIB, int(1.25 * fp))))

    out2d = pl.pallas_call(
        functools.partial(_mlp_streamed_kernel, n_sub=n_sub),
        out_shape=jax.ShapeDtypeStruct((M_pad, E), hidden_states.dtype),
        grid_spec=pltpu.PrefetchScalarGridSpec(
            num_scalar_prefetch=0,
            grid=grid,
            in_specs=[
                pl.BlockSpec((tm, E), lambda i, k: (i, 0)),    # x row tile
                pl.BlockSpec((E, ti), lambda i, k: (0, k)),    # W1 k-tile (streamed)
                pl.BlockSpec((1, ti), lambda i, k: (0, k)),    # b1 k-tile
                pl.BlockSpec((ti, E), lambda i, k: (k, 0)),    # W2 k-tile (streamed)
                pl.BlockSpec((1, E), lambda i, k: (0, 0)),     # b2 (tiny, resident)
            ],
            out_specs=pl.BlockSpec((tm, E), lambda i, k: (i, 0)),
            scratch_shapes=[pltpu.VMEM((tm, E), jnp.float32)],  # f32 accumulator
        ),
        compiler_params=pltpu.CompilerParams(
            dimension_semantics=("parallel", "arbitrary"),
            vmem_limit_bytes=vmem_limit,
        ),
        cost_estimate=cost,
    )(x_in, w_fc, b_fc.reshape(1, I_pad), w_proj, b_proj.reshape(1, E))
    out2d = out2d[:M] if M_pad != M else out2d
    return out2d.reshape(B, S, E)


# ------------------------------ reference / tests ------------------------------


def _reference(hidden_states, w_fc, b_fc, w_proj, b_proj):
    h = (hidden_states.astype(jnp.float32) @ w_fc.astype(jnp.float32)
         + b_fc.astype(jnp.float32))
    h = _gelu_new(h)
    o = h @ w_proj.astype(jnp.float32) + b_proj.astype(jnp.float32)
    return o.astype(hidden_states.dtype)


def _make_inputs(key, batch, seq, embed, intermediate, dtype):
    k_x, k_w1, k_b1, k_w2, k_b2 = jax.random.split(key, 5)
    x = jax.random.normal(k_x, (batch, seq, embed), dtype=jnp.float32).astype(dtype)
    w_fc = (0.02 * jax.random.normal(k_w1, (embed, intermediate),
                                     dtype=jnp.float32)).astype(dtype)
    b_fc = (0.02 * jax.random.normal(k_b1, (intermediate,),
                                     dtype=jnp.float32)).astype(dtype)
    w_proj = (0.02 * jax.random.normal(k_w2, (intermediate, embed),
                                       dtype=jnp.float32)).astype(dtype)
    b_proj = (0.02 * jax.random.normal(k_b2, (embed,),
                                       dtype=jnp.float32)).astype(dtype)
    return x, w_fc, b_fc, w_proj, b_proj


if __name__ == "__main__":
    key = jax.random.PRNGKey(0)
    k1, k2, k3, k4, k5 = jax.random.split(key, 5)

    # Test 1: small GPT2-ish config (hidden=32, intermediate=4*32=128), f32,
    # auto-selected weight-resident fast path.
    x, w1, b1, w2, b2 = _make_inputs(k1, batch=2, seq=8, embed=32,
                                     intermediate=128, dtype=jnp.float32)
    out = jax.block_until_ready(gpt2_mlp(x, w1, b1, w2, b2))
    ref = _reference(x, w1, b1, w2, b2)
    assert out.shape == x.shape
    assert jnp.allclose(out, ref, atol=1e-5, rtol=1e-5), "mismatch (test 1: resident)"

    # Test 2: force the k-streamed path with a multi-step grid and gelu/MXU
    # sub-chunk interleave (ti=512 -> 2 sub-chunks).
    x, w1, b1, w2, b2 = _make_inputs(k2, batch=2, seq=128, embed=128,
                                     intermediate=1024, dtype=jnp.float32)
    out = jax.block_until_ready(
        gpt2_mlp(x, w1, b1, w2, b2, row_tile=128, k_tile=512))
    ref = _reference(x, w1, b1, w2, b2)
    assert out.shape == x.shape
    assert jnp.allclose(out, ref, atol=1e-4, rtol=1e-4), "mismatch (test 2: streamed)"

    # Test 3: awkward row count (M=9 -> zero-padded to 16) + non-128 intermediate.
    x, w1, b1, w2, b2 = _make_inputs(k3, batch=1, seq=9, embed=32,
                                     intermediate=96, dtype=jnp.float32)
    out = jax.block_until_ready(gpt2_mlp(x, w1, b1, w2, b2))
    ref = _reference(x, w1, b1, w2, b2)
    assert out.shape == x.shape
    assert jnp.allclose(out, ref, atol=1e-5, rtol=1e-5), "mismatch (test 3: padding)"

    # Test 4: streamed path with intermediate-dim zero padding (I=384 -> 512).
    x, w1, b1, w2, b2 = _make_inputs(k4, batch=1, seq=64, embed=128,
                                     intermediate=384, dtype=jnp.float32)
    out = jax.block_until_ready(
        gpt2_mlp(x, w1, b1, w2, b2, row_tile=64, k_tile=256))
    ref = _reference(x, w1, b1, w2, b2)
    assert out.shape == x.shape
    assert jnp.allclose(out, ref, atol=1e-4, rtol=1e-4), "mismatch (test 4: I pad)"

    # Test 5: bf16 weights/activations (looser tolerance; f32 accumulation inside).
    x, w1, b1, w2, b2 = _make_inputs(k5, batch=2, seq=16, embed=64,
                                     intermediate=256, dtype=jnp.bfloat16)
    out = jax.block_until_ready(gpt2_mlp(x, w1, b1, w2, b2))
    ref = _reference(x, w1, b1, w2, b2)
    assert out.shape == x.shape
    assert jnp.allclose(out.astype(jnp.float32), ref.astype(jnp.float32),
                        atol=1e-3, rtol=1e-2), "mismatch (test 5: bf16)"

    print("KERNEL_OK")
</pallas_src>

<mosaic_0001>
module attributes {stable_mosaic.version = 11 : i64} {
  func.func @_mlp_resident_kernel(%arg0: i32, %arg1: memref<16x32xf32, #tpu.memory_space<vmem>>, %arg2: memref<32x128xf32, #tpu.memory_space<vmem>>, %arg3: memref<1x128xf32, #tpu.memory_space<vmem>>, %arg4: memref<128x32xf32, #tpu.memory_space<vmem>>, %arg5: memref<1x32xf32, #tpu.memory_space<vmem>>, %arg6: memref<16x32xf32, #tpu.memory_space<vmem>>) attributes {dimension_semantics = [#tpu.dimension_semantics<parallel>], iteration_bounds = array<i64: 1>, scalar_prefetch = 0 : i64, scratch_operands = 0 : i64, tpu.core_type = #tpu.core_type<tc>, window_params = [{transform_indices = @transform_0, window_bounds = array<i64: 16, 32>}, {pipeline_mode = #tpu.pipeline_mode<synchronous>, transform_indices = @transform_1, window_bounds = array<i64: 32, 128>}, {pipeline_mode = #tpu.pipeline_mode<synchronous>, transform_indices = @transform_2, window_bounds = array<i64: 1, 128>}, {pipeline_mode = #tpu.pipeline_mode<synchronous>, transform_indices = @transform_3, window_bounds = array<i64: 128, 32>}, {pipeline_mode = #tpu.pipeline_mode<synchronous>, transform_indices = @transform_4, window_bounds = array<i64: 1, 32>}, {transform_indices = @transform_5, window_bounds = array<i64: 16, 32>}]} {
    %c0 = arith.constant 0 : index
    %c0_0 = arith.constant 0 : index
    %0 = vector.load %arg1[%c0, %c0_0] : memref<16x32xf32, #tpu.memory_space<vmem>>, vector<16x32xf32>
    %c0_1 = arith.constant 0 : index
    %c0_2 = arith.constant 0 : index
    %1 = vector.load %arg2[%c0_1, %c0_2] : memref<32x128xf32, #tpu.memory_space<vmem>>, vector<32x128xf32>
    %cst = arith.constant dense<0.000000e+00> : vector<16x128xf32>
    %2 = tpu.matmul %0, %1, %cst {dimension_numbers = #tpu.dot_dimension_numbers<[1], [0], [0], [1], [0, 0, 1, 1], [], []>} : vector<16x32xf32>, vector<32x128xf32>, vector<16x128xf32> -> vector<16x128xf32>
    %c0_3 = arith.constant 0 : index
    %c0_4 = arith.constant 0 : index
    %3 = vector.load %arg3[%c0_3, %c0_4] : memref<1x128xf32, #tpu.memory_space<vmem>>, vector<1x128xf32>
    %4 = vector.broadcast %3 : vector<1x128xf32> to vector<16x128xf32>
    %5 = arith.addf %2, %4 : vector<16x128xf32>
    %cst_5 = arith.constant 5.000000e-01 : f32
    %6 = vector.broadcast %cst_5 : f32 to vector<16x128xf32>
    %7 = arith.mulf %6, %5 : vector<16x128xf32>
    %cst_6 = arith.constant 0.797884583 : f32
    %8 = vector.broadcast %cst_6 : f32 to vector<16x128xf32>
    %9 = arith.mulf %8, %5 : vector<16x128xf32>
    %10 = arith.mulf %5, %5 : vector<16x128xf32>
    %cst_7 = arith.constant 4.471500e-02 : f32
    %11 = vector.broadcast %cst_7 : f32 to vector<16x128xf32>
    %12 = arith.mulf %11, %10 : vector<16x128xf32>
    %cst_8 = arith.constant 1.000000e+00 : f32
    %13 = vector.broadcast %cst_8 : f32 to vector<16x128xf32>
    %14 = arith.addf %13, %12 : vector<16x128xf32>
    %15 = arith.mulf %9, %14 : vector<16x128xf32>
    %16 = math.tanh %15 : vector<16x128xf32>
    %cst_9 = arith.constant 1.000000e+00 : f32
    %17 = vector.broadcast %cst_9 : f32 to vector<16x128xf32>
    %18 = arith.addf %17, %16 : vector<16x128xf32>
    %19 = arith.mulf %7, %18 : vector<16x128xf32>
    %c0_10 = arith.constant 0 : index
    %c0_11 = arith.constant 0 : index
    %20 = vector.load %arg4[%c0_10, %c0_11] : memref<128x32xf32, #tpu.memory_space<vmem>>, vector<128x32xf32>
    %cst_12 = arith.constant dense<0.000000e+00> : vector<16x32xf32>
    %21 = tpu.matmul %19, %20, %cst_12 {dimension_numbers = #tpu.dot_dimension_numbers<[1], [0], [0], [1], [0, 0, 1, 1], [], []>} : vector<16x128xf32>, vector<128x32xf32>, vector<16x32xf32> -> vector<16x32xf32>
    %c0_13 = arith.constant 0 : index
    %c0_14 = arith.constant 0 : index
    %22 = vector.load %arg5[%c0_13, %c0_14] : memref<1x32xf32, #tpu.memory_space<vmem>>, vector<1x32xf32>
    %23 = vector.broadcast %22 : vector<1x32xf32> to vector<16x32xf32>
    %24 = arith.addf %21, %23 : vector<16x32xf32>
    %c0_15 = arith.constant 0 : index
    %c0_16 = arith.constant 0 : index
    %25 = vector.load %arg6[%c0_15, %c0_16] : memref<16x32xf32, #tpu.memory_space<vmem>>, vector<16x32xf32>
    tpu.vector_store %arg6[%c0_15, %c0_16], %24 {strides = array<i32>} : memref<16x32xf32, #tpu.memory_space<vmem>>, vector<16x32xf32>,
    return
  }
  func.func @transform_0(%arg0: i32) -> (i32, i32) {
    %c0_i32 = arith.constant 0 : i32
    %c0_i32_0 = arith.constant 0 : i32
    return %arg0, %c0_i32 : i32, i32
  }
  func.func @transform_1(%arg0: i32) -> (i32, i32) {
    %c0_i32 = arith.constant 0 : i32
    %c0_i32_0 = arith.constant 0 : i32
    %c0_i32_1 = arith.constant 0 : i32
    return %c0_i32, %c0_i32_0 : i32, i32
  }
  func.func @transform_2(%arg0: i32) -> (i32, i32) {
    %c0_i32 = arith.constant 0 : i32
    %c0_i32_0 = arith.constant 0 : i32
    %c0_i32_1 = arith.constant 0 : i32
    return %c0_i32, %c0_i32_0 : i32, i32
  }
  func.func @transform_3(%arg0: i32) -> (i32, i32) {
    %c0_i32 = arith.constant 0 : i32
    %c0_i32_0 = arith.constant 0 : i32
    %c0_i32_1 = arith.constant 0 : i32
    return %c0_i32, %c0_i32_0 : i32, i32
  }
  func.func @transform_4(%arg0: i32) -> (i32, i32) {
    %c0_i32 = arith.constant 0 : i32
    %c0_i32_0 = arith.constant 0 : i32
    %c0_i32_1 = arith.constant 0 : i32
    return %c0_i32, %c0_i32_0 : i32, i32
  }
  func.func @transform_5(%arg0: i32) -> (i32, i32) {
    %c0_i32 = arith.constant 0 : i32
    %c0_i32_0 = arith.constant 0 : i32
    return %arg0, %c0_i32 : i32, i32
  }
}

</mosaic_0001>

<llo_original>
// kernel: tpu_custom_call.1
$region0: #{tpu_custom_call.1}
  #allocation0 [shape = 'u32[]', space=smem, size = 0x4, offset = 0x4, fixed_abs, tag = 'smem constant byte address 0x4 - core index']
  #allocation1 [shape = 'u32[144,128]{1,0:T(1,128)}', space=vmem, size = 0x12000, scoped, tag = 'internal scratch']
  %s0 = inlined_call_operand.vmem [shape: f32[16,32], index: 0, kind: input, shape index: {}]
  %s1 = inlined_call_operand.vmem [shape: f32[32,128], index: 1, kind: input, shape index: {}]
  %s2 = inlined_call_operand.vmem [shape: f32[1,128], index: 2, kind: input, shape index: {}]
  %s3 = inlined_call_operand.vmem [shape: f32[128,32], index: 3, kind: input, shape index: {}]
  %s4 = inlined_call_operand.vmem [shape: f32[1,32], index: 4, kind: input, shape index: {}]
  %s5 = inlined_call_operand.hbm [shape: f32[16,32], index: 5, kind: output, shape index: {}]
  %s6 = sld [smem:[#allocation0]]
  $region30: #{tpu_custom_call.1} parent=0
    _
  %s8 = ssub.s32 1, %s6
  %s9 = scalar_select 0, %s8, %s6
  $region1: #{tpu_custom_call.1} parent=0
    #allocation2 [shape = 'u8[8192]{0}', space=vmem, size = 0x2000, scoped, tag = 'output window, operand 0, single buffered']
    #allocation3 [shape = 's32[1]{0}', space=sflag, size = 0x4, scoped, tag = 'scoped memory for tpu_custom_call.1']
    %10 = vsyncpa [#allocation3], 0
    // Predicated region
    $region2: #{tpu_custom_call.1} parent=1 // pred_check
      _
    $region3: #{tpu_custom_call.1} parent=1 // pred_check_branch
      %12 = sbr.rel (0) target = $region5
    $region4: #{tpu_custom_call.1} parent=1 // pred_region
      _
    $region5: #{tpu_custom_call.1} parent=1 // pred_fallthru
      _
    // Predicated region
    $region6: #{tpu_custom_call.1} parent=1 // pred_check
      _
    $region7: #{tpu_custom_call.1} parent=1 // pred_check_branch
      %14 = sbr.rel (0) target = $region9
    $region8: #{tpu_custom_call.1} parent=1 // pred_region
      _
    $region9: #{tpu_custom_call.1} parent=1 // pred_fallthru
      _
    // Predicated region
    $region10: #{tpu_custom_call.1} parent=1 // pred_check
      _
    $region11: #{tpu_custom_call.1} parent=1 // pred_check_branch
      %16 = sbr.rel (0) target = $region13
    $region12: #{tpu_custom_call.1} parent=1 // pred_region
      _
    $region13: #{tpu_custom_call.1} parent=1 // pred_fallthru
      _
    // Predicated region
    $region14: #{tpu_custom_call.1} parent=1 // pred_check
      _
    $region15: #{tpu_custom_call.1} parent=1 // pred_check_branch
      %18 = sbr.rel (0) target = $region17
    $region16: #{tpu_custom_call.1} parent=1 // pred_region
      _
    $region17: #{tpu_custom_call.1} parent=1 // pred_fallthru
      _
    // Predicated region
    $region18: #{tpu_custom_call.1} parent=1 // pred_check
      _
    $region19: #{tpu_custom_call.1} parent=1 // pred_check_branch
      %20 = sbr.rel (0) target = $region21
    $region20: #{tpu_custom_call.1} parent=1 // pred_region
      _
    $region21: #{tpu_custom_call.1} parent=1 // pred_fallthru
      _
    %v21 = vld [vmem:[%s0] sm:$0xff]
    %v22 = vld [vmem:[%s0 + $0x8] sm:$0xff]
    %v23 = vld [vmem:[%s1] sm:$0xff]
    %v24 = vld [vmem:[%s1 + $0x8] sm:$0xff]
    %v25 = vld [vmem:[%s1 + $0x10] sm:$0xff]
    %v26 = vld [vmem:[%s1 + $0x18] sm:$0xff]
    %v27 = vld [vmem:[%s2] sm:$0x1]
    %v29 = vlaneseq
    %v30 = vshrl.u32 %v29, 7
    %v31 = vsub.s32 0, %v30
    %v32 = vrot.slane %v27, %v31
    %vm34 = vcmask 261120
    %v36 = vsel %vm34, %v21, 0
    %v39 = vsel %vm34, %v22, 0
    %41 = vmatprep.subr.mxu0 0.0
    %42 = vmatpush1.msra.mxu0 0.0
    %43 = vmatprep.subr.mxu0 0.0
    %44 = vmatpush1.msra.mxu0 0.0
    %45 = vmatprep.subr.mxu0 0.0
    %46 = vmatpush1.msra.mxu0 0.0
    %47 = vmatprep.subr.mxu0 0.0
    %48 = vmatpush1.msra.mxu0 0.0
    %49 = vmatprep.subr.mxu0 0.0
    %50 = vmatpush1.msra.mxu0 0.0
    %51 = vmatprep.subr.mxu0 0.0
    %52 = vmatpush1.msra.mxu0 0.0
    %53 = vmatprep.subr.mxu0 0.0
    %54 = vmatpush1.msra.mxu0 0.0
    %55 = vmatprep.subr.mxu0 0.0
    %56 = vmatpush1.msra.mxu0 0.0
    %57 = vmatprep.subr.mxu0 0.0
    %58 = vmatpush1.msra.mxu0 0.0
    %59 = vmatprep.subr.mxu0 0.0
    %60 = vmatpush1.msra.mxu0 0.0
    %61 = vmatprep.subr.mxu0 0.0
    %62 = vmatpush1.msra.mxu0 0.0
    %63 = vmatprep.subr.mxu0 0.0
    %64 = vmatpush1.msra.mxu0 0.0
    %65 = vmatprep.subr.mxu0 0.0
    %66 = vmatpush1.msra.mxu0 %v26
    %67 = vmatprep.subr.mxu0 0.0
    %68 = vmatpush1.msra.mxu0 %v25
    %69 = vmatprep.subr.mxu0 0.0
    %70 = vmatpush1.msra.mxu0 %v24
    %71 = vmatprep.subr.mxu0 0.0
    %72 = vmatpush1.msra.mxu0 %v23
    %73 = vmatprep.subr.mxu0 0.0
    %74 = vmatpush2.msra.mxu0 0.0
    %75 = vmatprep.subr.mxu0 0.0
    %76 = vmatpush2.msra.mxu0 0.0
    %77 = vmatprep.subr.mxu0 0.0
    %78 = vmatpush2.msra.mxu0 0.0
    %79 = vmatprep.subr.mxu0 0.0
    %80 = vmatpush2.msra.mxu0 0.0
    %81 = vmatprep.subr.mxu0 0.0
    %82 = vmatpush2.msra.mxu0 0.0
    %83 = vmatprep.subr.mxu0 0.0
    %84 = vmatpush2.msra.mxu0 0.0
    %85 = vmatprep.subr.mxu0 0.0
    %86 = vmatpush2.msra.mxu0 0.0
    %87 = vmatprep.subr.mxu0 0.0
    %88 = vmatpush2.msra.mxu0 0.0
    %89 = vmatprep.subr.mxu0 0.0
    %90 = vmatpush2.msra.mxu0 0.0
    %91 = vmatprep.subr.mxu0 0.0
    %92 = vmatpush2.msra.mxu0 0.0
    %93 = vmatprep.subr.mxu0 0.0
    %94 = vmatpush2.msra.mxu0 0.0
    %95 = vmatprep.subr.mxu0 0.0
    %96 = vmatpush2.msra.mxu0 0.0
    %97 = vmatprep.subr.mxu0 0.0
    %98 = vmatpush2.msra.mxu0 0.0
    %99 = vmatprep.subr.mxu0 0.0
    %100 = vmatpush2.msra.mxu0 0.0
    %101 = vmatprep.subr.mxu0 0.0
    %102 = vmatpush2.msra.mxu0 0.0
    %103 = vmatprep.subr.mxu0 0.0
    %104 = vmatpush2.msra.mxu0 0.0
    %105 = vmatprep.mubr.f32.mxu0 0.0
    %106 = vmatmul.mubr.f32.gmra.mxu0 %v36
    %v107 = vpop.f32.mrf.mxu0
    %v108 = vadd.f32 %v32, %v107
    %v109 = vpop.f32.mrf.mxu0
    %110 = vmatprep.mubr.f32.mxu0 0.0
    %111 = vmatmul.mubr.f32.gmra.mxu0 %v39
    %v112 = vpop.f32.mrf.mxu0
    %v113 = vadd.f32 %v32, %v112
    %v114 = vpop.f32.mrf.mxu0
    %115 = vdwg.mxu0
    %v116 = vmul.f32 %v108, 0.5
    %v117 = vmul.f32 %v113, 0.5
    %v118 = vmul.f32 %v108, 0.7978846
    %v119 = vmul.f32 %v113, 0.7978846
    %v120 = vmul.f32 %v108, %v108
    %v121 = vmul.f32 %v113, %v113
    %v122 = vmul.f32 %v120, 0.044715
    %v123 = vmul.f32 %v121, 0.044715
    %v124 = vadd.f32 %v122, 1.0
    %v125 = vadd.f32 %v123, 1.0
    %v126 = vmul.f32 %v118, %v124
    %v127 = vmul.f32 %v119, %v125
    %v128 = vtanh.pop %v126
    %v129 = vtanh.pop %v127
    %v130 = vadd.f32 %v128, 1.0
    %v131 = vadd.f32 %v129, 1.0
    %v132 = vmul.f32 %v116, %v130
    %v133 = vmul.f32 %v117, %v131
    %v134 = vld [vmem:[%s3] sm:$0xff]
    %v135 = vld [vmem:[%s3 + $0x8] sm:$0xff]
    %v136 = vld [vmem:[%s3 + $0x10] sm:$0xff]
    %v137 = vld [vmem:[%s3 + $0x18] sm:$0xff]
    %v138 = vld [vmem:[%s3 + $0x20] sm:$0xff]
    %v139 = vld [vmem:[%s3 + $0x28] sm:$0xff]
    %v140 = vld [vmem:[%s3 + $0x30] sm:$0xff]
    %v141 = vld [vmem:[%s3 + $0x38] sm:$0xff]
    %v142 = vld [vmem:[%s3 + $0x40] sm:$0xff]
    %v143 = vld [vmem:[%s3 + $0x48] sm:$0xff]
    %v144 = vld [vmem:[%s3 + $0x50] sm:$0xff]
    %v145 = vld [vmem:[%s3 + $0x58] sm:$0xff]
    %v146 = vld [vmem:[%s3 + $0x60] sm:$0xff]
    %v147 = vld [vmem:[%s3 + $0x68] sm:$0xff]
    %v148 = vld [vmem:[%s3 + $0x70] sm:$0xff]
    %v149 = vld [vmem:[%s3 + $0x78] sm:$0xff]
    %v150 = vld [vmem:[%s4] sm:$0x1]
    %v152 = vlaneseq
    %v153 = vshrl.u32 %v152, 7
    %v154 = vsub.s32 0, %v153
    %v155 = vrot.slane %v150, %v154
    %157 = vmatprep.subr.mxu0 0.0
    %158 = vmatpush1.msra.mxu0 %v149
    %159 = vmatprep.subr.mxu0 0.0
    %160 = vmatpush1.msra.mxu0 %v148
    %161 = vmatprep.subr.mxu0 0.0
    %162 = vmatpush1.msra.mxu0 %v147
    %163 = vmatprep.subr.mxu0 0.0
    %164 = vmatpush1.msra.mxu0 %v146
    %165 = vmatprep.subr.mxu0 0.0
    %166 = vmatpush1.msra.mxu0 %v145
    %167 = vmatprep.subr.mxu0 0.0
    %168 = vmatpush1.msra.mxu0 %v144
    %169 = vmatprep.subr.mxu0 0.0
    %170 = vmatpush1.msra.mxu0 %v143
    %171 = vmatprep.subr.mxu0 0.0
    %172 = vmatpush1.msra.mxu0 %v142
    %173 = vmatprep.subr.mxu0 0.0
    %174 = vmatpush1.msra.mxu0 %v141
    %175 = vmatprep.subr.mxu0 0.0
    %176 = vmatpush1.msra.mxu0 %v140
    %177 = vmatprep.subr.mxu0 0.0
    %178 = vmatpush1.msra.mxu0 %v139
    %179 = vmatprep.subr.mxu0 0.0
    %180 = vmatpush1.msra.mxu0 %v138
    %181 = vmatprep.subr.mxu0 0.0
    %182 = vmatpush1.msra.mxu0 %v137
    %183 = vmatprep.subr.mxu0 0.0
    %184 = vmatpush1.msra.mxu0 %v136
    %185 = vmatprep.subr.mxu0 0.0
    %186 = vmatpush1.msra.mxu0 %v135
    %187 = vmatprep.subr.mxu0 0.0
    %188 = vmatpush1.msra.mxu0 %v134
    %189 = vmatprep.subr.mxu0 0.0
    %190 = vmatpush2.msra.mxu0 0.0
    %191 = vmatprep.subr.mxu0 0.0
    %192 = vmatpush2.msra.mxu0 0.0
    %193 = vmatprep.subr.mxu0 0.0
    %194 = vmatpush2.msra.mxu0 0.0
    %195 = vmatprep.subr.mxu0 0.0
    %196 = vmatpush2.msra.mxu0 0.0
    %197 = vmatprep.subr.mxu0 0.0
    %198 = vmatpush2.msra.mxu0 0.0
    %199 = vmatprep.subr.mxu0 0.0
    %200 = vmatpush2.msra.mxu0 0.0
    %201 = vmatprep.subr.mxu0 0.0
    %202 = vmatpush2.msra.mxu0 0.0
    %203 = vmatprep.subr.mxu0 0.0
    %204 = vmatpush2.msra.mxu0 0.0
    %205 = vmatprep.subr.mxu0 0.0
    %206 = vmatpush2.msra.mxu0 0.0
    %207 = vmatprep.subr.mxu0 0.0
    %208 = vmatpush2.msra.mxu0 0.0
    %209 = vmatprep.subr.mxu0 0.0
    %210 = vmatpush2.msra.mxu0 0.0
    %211 = vmatprep.subr.mxu0 0.0
    %212 = vmatpush2.msra.mxu0 0.0
    %213 = vmatprep.subr.mxu0 0.0
    %214 = vmatpush2.msra.mxu0 0.0
    %215 = vmatprep.subr.mxu0 0.0
    %216 = vmatpush2.msra.mxu0 0.0
    %217 = vmatprep.subr.mxu0 0.0
    %218 = vmatpush2.msra.mxu0 0.0
    %219 = vmatprep.subr.mxu0 0.0
    %220 = vmatpush2.msra.mxu0 0.0
    %221 = vmatprep.mubr.f32.mxu0 0.0
    %222 = vmatmul.mubr.f32.gmra.mxu0 %v132
    %v223 = vpop.f32.mrf.mxu0
    %v224 = vadd.f32 %v155, %v223
    %v225 = vpop.f32.mrf.mxu0
    %226 = vmatprep.mubr.f32.mxu0 0.0
    %227 = vmatmul.mubr.f32.gmra.mxu0 %v133
    %v228 = vpop.f32.mrf.mxu0
    %v229 = vadd.f32 %v155, %v228
    %v230 = vpop.f32.mrf.mxu0
    %231 = vdwg.mxu0
    %232 = vst.msk [vmem:[#allocation2] sm:$0xff] %vm34, %v224
    %233 = vst.msk [vmem:[#allocation2 + $0x8] sm:$0xff] %vm34, %v229
    // Predicated region
    $region22: #{tpu_custom_call.1} parent=1 // pred_check
      _
    $region23: #{tpu_custom_call.1} parent=1 // pred_check_branch
      %235 = sbr.rel (0) target = $region25
    $region24: #{tpu_custom_call.1} parent=1 // pred_region
      %s237 = ssub.s32 256, 256
      %238 = vsyncadd [#allocation3], %s237
      %s239 = sshll.u32 [#allocation2], 4
      %s240 = int_to_ptr.vmem [resolvable:$true] %s239
      %245 = dma.vmem_to_hbm [thread:$0]  %s240, 256, %s5, [#allocation3], 128, 128, 8
    $region25: #{tpu_custom_call.1} parent=1 // pred_fallthru
      _
    // Predicated region
    $region26: #{tpu_custom_call.1} parent=1 // pred_check
      _
    $region27: #{tpu_custom_call.1} parent=1 // pred_check_branch
      %247 = sbr.rel (0) target = $region29
    $region28: #{tpu_custom_call.1} parent=1 // pred_region
      %248 = dma.done [#allocation3], 256
    $region29: #{tpu_custom_call.1} parent=1 // pred_fallthru
      _
    %249 = vsyncpa [#allocation3], 1

</llo_original>
